<compile_context>
chip_gen: v7x
topology: tpu7x:2x2x1
jax: 0.10.0
libtpu: 0.0.40
codegen_flags: <defaults>
</compile_context>

<pallas_src>
import functools

import numpy as np
import jax
import jax.numpy as jnp
from jax.experimental import pallas as pl
from jax.experimental.pallas import tpu as pltpu

SUB = 8      # f32 sublane width
LANE = 128   # lane width


def _rnd(x, m):
    return ((x + m - 1) // m) * m


# ---------------------------------------------------------------------------
# Parameter preparation — run ONCE, outside the per-step forward path
# ---------------------------------------------------------------------------
def prepare_params(w_ih, w_hh, b_ih, b_hh):
    """PyTorch layout  w_ih [4H, In], w_hh [4H, H], b_* [4H]
       Kernel layout   wih  [In_pad8, 4H], whh [H, 4H], b [1, 4H] (b_ih+b_hh)."""
    four_h, in_size = w_ih.shape
    hidden = w_hh.shape[1]
    assert four_h == 4 * hidden
    assert hidden % LANE == 0, "hidden_size must be a multiple of 128 (default 256 is)"
    in_pad = _rnd(in_size, SUB)                     # sublane padding only
    wih = jnp.pad(jnp.asarray(w_ih, jnp.float32).T,
                  ((0, in_pad - in_size), (0, 0)))  # [In_pad, 4H]
    whh = jnp.asarray(w_hh, jnp.float32).T          # [H, 4H]
    b = (jnp.asarray(b_ih, jnp.float32) + jnp.asarray(b_hh, jnp.float32))[None, :]
    return {'wih': wih, 'whh': whh, 'b': b}


# ---------------------------------------------------------------------------
# Kernel
# ---------------------------------------------------------------------------
def _sigmoid(x):
    return 1.0 / (1.0 + jnp.exp(-x))


def _lstm_kernel(x_ref, h0_ref, c0_ref, wih_ref, whh_ref, b_ref,
                 out_ref, hn_ref, cn_ref, h_scr, c_scr, *, hidden):
    t = pl.program_id(0)

    @pl.when(t == 0)
    def _():
        h_scr[...] = h0_ref[...]
        c_scr[...] = c0_ref[...]

    x = x_ref[0]            # [Bp, In_pad]
    h = h_scr[...]          # [Bp, H]
    c = c_scr[...]

    # Both matmuls hit the MXU with a f32 accumulator; bias is a single fused row.
    gates = (jnp.dot(x, wih_ref[...], preferred_element_type=jnp.float32)
             + jnp.dot(h, whh_ref[...], preferred_element_type=jnp.float32)
             + b_ref[...])                                    # [Bp, 4H]

    # hidden is a multiple of 128 → each gate slice is whole vregs (no lane shifts).
    i_g = _sigmoid(gates[:, 0 * hidden:1 * hidden])
    f_g = _sigmoid(gates[:, 1 * hidden:2 * hidden])
    g_g = jnp.tanh(gates[:, 2 * hidden:3 * hidden])
    o_g = _sigmoid(gates[:, 3 * hidden:4 * hidden])

    c_new = f_g * c + i_g * g_g
    h_new = o_g * jnp.tanh(c_new)

    h_scr[...] = h_new
    c_scr[...] = c_new
    out_ref[0] = h_new

    @pl.when(t == pl.num_programs(0) - 1)
    def _():
        hn_ref[...] = h_new
        cn_ref[...] = c_new


# ---------------------------------------------------------------------------
# Wrapper (jitted; single pallas_call per forward)
# ---------------------------------------------------------------------------
def _memory_forward_impl(params, x_seq, hx, cx):
    """x_seq: [T, B, In] f32; hx, cx: [1, B, H] f32 (num_layers == 1).
    Returns out [T, B, H] and updated (hx, cx)."""
    T, B, in_size = x_seq.shape
    in_pad, four_h = params['wih'].shape
    hidden = four_h // 4
    b_pad = _rnd(B, SUB)

    xp = jnp.pad(x_seq.astype(jnp.float32),
                 ((0, 0), (0, b_pad - B), (0, in_pad - in_size)))
    h0 = jnp.pad(hx[0].astype(jnp.float32), ((0, b_pad - B), (0, 0)))
    c0 = jnp.pad(cx[0].astype(jnp.float32), ((0, b_pad - B), (0, 0)))

    kernel = functools.partial(_lstm_kernel, hidden=hidden)

    out_p, hn_p, cn_p = pl.pallas_call(
        kernel,
        grid=(T,),
        in_specs=[
            pl.BlockSpec((1, b_pad, in_pad), lambda t: (t, 0, 0)),   # x_t (streamed)
            pl.BlockSpec((b_pad, hidden), lambda t: (0, 0)),         # h0 (resident)
            pl.BlockSpec((b_pad, hidden), lambda t: (0, 0)),         # c0 (resident)
            pl.BlockSpec((in_pad, four_h), lambda t: (0, 0)),        # W_ih^T (DMA'd once)
            pl.BlockSpec((hidden, four_h), lambda t: (0, 0)),        # W_hh^T (DMA'd once)
            pl.BlockSpec((1, four_h), lambda t: (0, 0)),             # fused bias
        ],
        out_specs=[
            pl.BlockSpec((1, b_pad, hidden), lambda t: (t, 0, 0)),   # out (per step)
            pl.BlockSpec((b_pad, hidden), lambda t: (0, 0)),         # h_n (final only)
            pl.BlockSpec((b_pad, hidden), lambda t: (0, 0)),         # c_n (final only)
        ],
        out_shape=[
            jax.ShapeDtypeStruct((T, b_pad, hidden), jnp.float32),
            jax.ShapeDtypeStruct((b_pad, hidden), jnp.float32),
            jax.ShapeDtypeStruct((b_pad, hidden), jnp.float32),
        ],
        scratch_shapes=[
            pltpu.VMEM((b_pad, hidden), jnp.float32),   # h carried across steps
            pltpu.VMEM((b_pad, hidden), jnp.float32),   # c carried across steps
        ],
        compiler_params=pltpu.CompilerParams(
            dimension_semantics=("arbitrary",)),        # time axis is a recurrence
    )(xp, h0, c0, params['wih'], params['whh'], params['b'])

    return out_p[:, :B, :], hn_p[None, :B, :], cn_p[None, :B, :]


memory_forward = jax.jit(_memory_forward_impl)


def memory_step(params, x, hx, cx):
    """Inference path (masks=None): out, (hx, cx) = rnn(input.unsqueeze(0), (hx, cx))."""
    return memory_forward(params, x[None], hx, cx)


def memory_reset(hx, cx, dones):
    """reset(dones): zero hidden state of finished envs (plain-JAX glue, not a kernel)."""
    keep = jnp.logical_not(dones).astype(hx.dtype)[None, :, None]
    return hx * keep, cx * keep


# ---------------------------------------------------------------------------
# Pure-JAX reference (nn.LSTM math) for correctness checking
# ---------------------------------------------------------------------------
def _ref_lstm(w_ih, w_hh, b_ih, b_hh, x_seq, h0, c0):
    def step(carry, x):
        h, c = carry
        gates = (jnp.dot(x, w_ih.T, precision=jax.lax.Precision.HIGHEST)
                 + jnp.dot(h, w_hh.T, precision=jax.lax.Precision.HIGHEST)
                 + b_ih + b_hh)
        i, f, g, o = jnp.split(gates, 4, axis=-1)
        c = _sigmoid(f) * c + _sigmoid(i) * jnp.tanh(g)
        h = _sigmoid(o) * jnp.tanh(c)
        return (h, c), h

    (hn, cn), out = jax.lax.scan(step, (h0, c0), x_seq)
    return out, hn, cn


# ---------------------------------------------------------------------------
if __name__ == "__main__":
    INPUT_SIZE = 45      # e.g. num_obs fed into Memory
    HIDDEN_SIZE = 256    # nn.LSTM default in the module
    NUM_ENV = 4
    SEQ_LEN = 8

    root = jax.random.PRNGKey(0)
    k_wi, k_wh, k_bi, k_bh, k_x1, k_xs = jax.random.split(root, 6)
    lim = 1.0 / np.sqrt(HIDDEN_SIZE)
    w_ih = jax.random.uniform(k_wi, (4 * HIDDEN_SIZE, INPUT_SIZE), jnp.float32, -lim, lim)
    w_hh = jax.random.uniform(k_wh, (4 * HIDDEN_SIZE, HIDDEN_SIZE), jnp.float32, -lim, lim)
    b_ih = jax.random.uniform(k_bi, (4 * HIDDEN_SIZE,), jnp.float32, -lim, lim)
    b_hh = jax.random.uniform(k_bh, (4 * HIDDEN_SIZE,), jnp.float32, -lim, lim)

    params = prepare_params(w_ih, w_hh, b_ih, b_hh)   # padding/transpose happens ONCE

    hx = jnp.zeros((1, NUM_ENV, HIDDEN_SIZE), jnp.float32)
    cx = jnp.zeros((1, NUM_ENV, HIDDEN_SIZE), jnp.float32)

    # inference path (masks=None): single step
    x_step = jax.random.normal(k_x1, (NUM_ENV, INPUT_SIZE), jnp.float32)
    out1, hx1, cx1 = memory_step(params, x_step, hx, cx)

    # batch (policy-update) path: padded trajectory through the same kernel
    x_seq = jax.random.normal(k_xs, (SEQ_LEN, NUM_ENV, INPUT_SIZE), jnp.float32)
    out_seq, hxn, cxn = memory_forward(params, x_seq, hx, cx)
    jax.block_until_ready((out1, hx1, cx1, out_seq, hxn, cxn))

    # correctness vs. pure-JAX reference
    r_out1, r_h1, r_c1 = _ref_lstm(w_ih, w_hh, b_ih, b_hh, x_step[None], hx[0], cx[0])
    r_outs, r_hn, r_cn = _ref_lstm(w_ih, w_hh, b_ih, b_hh, x_seq, hx[0], cx[0])

    np.testing.assert_allclose(np.asarray(out1), np.asarray(r_out1), rtol=1e-3, atol=5e-3)
    np.testing.assert_allclose(np.asarray(hx1[0]), np.asarray(r_h1), rtol=1e-3, atol=5e-3)
    np.testing.assert_allclose(np.asarray(cx1[0]), np.asarray(r_c1), rtol=1e-3, atol=5e-3)
    np.testing.assert_allclose(np.asarray(out_seq), np.asarray(r_outs), rtol=1e-3, atol=5e-3)
    np.testing.assert_allclose(np.asarray(hxn[0]), np.asarray(r_hn), rtol=1e-3, atol=5e-3)
    np.testing.assert_allclose(np.asarray(cxn[0]), np.asarray(r_cn), rtol=1e-3, atol=5e-3)

    # reset(dones) glue (not a kernel)
    dones = jnp.array([False, True, False, True])
    hx_r, cx_r = memory_reset(hxn, cxn, dones)
    jax.block_until_ready((hx_r, cx_r))

    print("KERNEL_OK")
</pallas_src>

<mosaic_0001>
module attributes {stable_mosaic.version = 11 : i64} {
  func.func @_lstm_kernel(%arg0: i32, %arg1: memref<1x8x48xf32, #tpu.memory_space<vmem>>, %arg2: memref<8x256xf32, #tpu.memory_space<vmem>>, %arg3: memref<8x256xf32, #tpu.memory_space<vmem>>, %arg4: memref<48x1024xf32, #tpu.memory_space<vmem>>, %arg5: memref<256x1024xf32, #tpu.memory_space<vmem>>, %arg6: memref<1x1024xf32, #tpu.memory_space<vmem>>, %arg7: memref<1x8x256xf32, #tpu.memory_space<vmem>>, %arg8: memref<8x256xf32, #tpu.memory_space<vmem>>, %arg9: memref<8x256xf32, #tpu.memory_space<vmem>>, %arg10: memref<8x256xf32, #tpu.memory_space<vmem>>, %arg11: memref<8x256xf32, #tpu.memory_space<vmem>>) attributes {dimension_semantics = [#tpu.dimension_semantics<arbitrary>], iteration_bounds = array<i64: 1>, scalar_prefetch = 0 : i64, scratch_operands = 2 : i64, tpu.core_type = #tpu.core_type<tc>, window_params = [{transform_indices = @transform_0, window_bounds = array<i64: 1, 8, 48>}, {pipeline_mode = #tpu.pipeline_mode<synchronous>, transform_indices = @transform_1, window_bounds = array<i64: 8, 256>}, {pipeline_mode = #tpu.pipeline_mode<synchronous>, transform_indices = @transform_2, window_bounds = array<i64: 8, 256>}, {pipeline_mode = #tpu.pipeline_mode<synchronous>, transform_indices = @transform_3, window_bounds = array<i64: 48, 1024>}, {pipeline_mode = #tpu.pipeline_mode<synchronous>, transform_indices = @transform_4, window_bounds = array<i64: 256, 1024>}, {pipeline_mode = #tpu.pipeline_mode<synchronous>, transform_indices = @transform_5, window_bounds = array<i64: 1, 1024>}, {transform_indices = @transform_6, window_bounds = array<i64: 1, 8, 256>}, {pipeline_mode = #tpu.pipeline_mode<synchronous>, transform_indices = @transform_7, window_bounds = array<i64: 8, 256>}, {pipeline_mode = #tpu.pipeline_mode<synchronous>, transform_indices = @transform_8, window_bounds = array<i64: 8, 256>}]} {
    %c0_i32 = arith.constant 0 : i32
    %0 = arith.cmpi eq, %arg0, %c0_i32 : i32
    %1 = arith.extui %0 : i1 to i32
    %c0_i32_0 = arith.constant 0 : i32
    %2 = arith.cmpi ne, %1, %c0_i32_0 : i32
    scf.if %2 {
      %c0_32 = arith.constant 0 : index
      %c0_33 = arith.constant 0 : index
      %54 = vector.load %arg2[%c0_32, %c0_33] : memref<8x256xf32, #tpu.memory_space<vmem>>, vector<8x256xf32>
      %c0_34 = arith.constant 0 : index
      %c0_35 = arith.constant 0 : index
      %55 = vector.load %arg10[%c0_34, %c0_35] : memref<8x256xf32, #tpu.memory_space<vmem>>, vector<8x256xf32>
      tpu.vector_store %arg10[%c0_34, %c0_35], %54 {strides = array<i32>} : memref<8x256xf32, #tpu.memory_space<vmem>>, vector<8x256xf32>,
      %c0_36 = arith.constant 0 : index
      %c0_37 = arith.constant 0 : index
      %56 = vector.load %arg3[%c0_36, %c0_37] : memref<8x256xf32, #tpu.memory_space<vmem>>, vector<8x256xf32>
      %c0_38 = arith.constant 0 : index
      %c0_39 = arith.constant 0 : index
      %57 = vector.load %arg11[%c0_38, %c0_39] : memref<8x256xf32, #tpu.memory_space<vmem>>, vector<8x256xf32>
      tpu.vector_store %arg11[%c0_38, %c0_39], %56 {strides = array<i32>} : memref<8x256xf32, #tpu.memory_space<vmem>>, vector<8x256xf32>,
    } else {
    }
    %c0 = arith.constant 0 : index
    %c0_1 = arith.constant 0 : index
    %c0_2 = arith.constant 0 : index
    %3 = vector.load %arg1[%c0, %c0_1, %c0_2] : memref<1x8x48xf32, #tpu.memory_space<vmem>>, vector<1x8x48xf32>
    %4 = vector.shape_cast %3 : vector<1x8x48xf32> to vector<8x48xf32>
    %c0_3 = arith.constant 0 : index
    %c0_4 = arith.constant 0 : index
    %5 = vector.load %arg10[%c0_3, %c0_4] : memref<8x256xf32, #tpu.memory_space<vmem>>, vector<8x256xf32>
    %c0_5 = arith.constant 0 : index
    %c0_6 = arith.constant 0 : index
    %6 = vector.load %arg11[%c0_5, %c0_6] : memref<8x256xf32, #tpu.memory_space<vmem>>, vector<8x256xf32>
    %c0_7 = arith.constant 0 : index
    %c0_8 = arith.constant 0 : index
    %7 = vector.load %arg4[%c0_7, %c0_8] : memref<48x1024xf32, #tpu.memory_space<vmem>>, vector<48x1024xf32>
    %cst = arith.constant dense<0.000000e+00> : vector<8x1024xf32>
    %8 = tpu.matmul %4, %7, %cst {dimension_numbers = #tpu.dot_dimension_numbers<[1], [0], [0], [1], [0, 0, 1, 1], [], []>} : vector<8x48xf32>, vector<48x1024xf32>, vector<8x1024xf32> -> vector<8x1024xf32>
    %c0_9 = arith.constant 0 : index
    %c0_10 = arith.constant 0 : index
    %9 = vector.load %arg5[%c0_9, %c0_10] : memref<256x1024xf32, #tpu.memory_space<vmem>>, vector<256x1024xf32>
    %cst_11 = arith.constant dense<0.000000e+00> : vector<8x1024xf32>
    %10 = tpu.matmul %5, %9, %cst_11 {dimension_numbers = #tpu.dot_dimension_numbers<[1], [0], [0], [1], [0, 0, 1, 1], [], []>} : vector<8x256xf32>, vector<256x1024xf32>, vector<8x1024xf32> -> vector<8x1024xf32>
    %11 = arith.addf %8, %10 : vector<8x1024xf32>
    %c0_12 = arith.constant 0 : index
    %c0_13 = arith.constant 0 : index
    %12 = vector.load %arg6[%c0_12, %c0_13] : memref<1x1024xf32, #tpu.memory_space<vmem>>, vector<1x1024xf32>
    %13 = vector.broadcast %12 : vector<1x1024xf32> to vector<8x1024xf32>
    %14 = arith.addf %11, %13 : vector<8x1024xf32>
    %15 = vector.extract_strided_slice %14 {offsets = [0, 0], sizes = [8, 256], strides = [1, 1]} : vector<8x1024xf32> to vector<8x256xf32>
    %cst_14 = arith.constant 0.000000e+00 : f32
    %16 = vector.broadcast %cst_14 : f32 to vector<8x256xf32>
    %17 = arith.subf %16, %15 : vector<8x256xf32>
    %18 = math.exp %17 : vector<8x256xf32>
    %cst_15 = arith.constant 1.000000e+00 : f32
    %19 = vector.broadcast %cst_15 : f32 to vector<8x256xf32>
    %20 = arith.addf %19, %18 : vector<8x256xf32>
    %cst_16 = arith.constant 1.000000e+00 : f32
    %21 = vector.broadcast %cst_16 : f32 to vector<8x256xf32>
    %22 = arith.divf %21, %20 : vector<8x256xf32>
    %23 = vector.extract_strided_slice %14 {offsets = [0, 256], sizes = [8, 256], strides = [1, 1]} : vector<8x1024xf32> to vector<8x256xf32>
    %cst_17 = arith.constant 0.000000e+00 : f32
    %24 = vector.broadcast %cst_17 : f32 to vector<8x256xf32>
    %25 = arith.subf %24, %23 : vector<8x256xf32>
    %26 = math.exp %25 : vector<8x256xf32>
    %cst_18 = arith.constant 1.000000e+00 : f32
    %27 = vector.broadcast %cst_18 : f32 to vector<8x256xf32>
    %28 = arith.addf %27, %26 : vector<8x256xf32>
    %cst_19 = arith.constant 1.000000e+00 : f32
    %29 = vector.broadcast %cst_19 : f32 to vector<8x256xf32>
    %30 = arith.divf %29, %28 : vector<8x256xf32>
    %31 = vector.extract_strided_slice %14 {offsets = [0, 512], sizes = [8, 256], strides = [1, 1]} : vector<8x1024xf32> to vector<8x256xf32>
    %32 = math.tanh %31 : vector<8x256xf32>
    %33 = vector.extract_strided_slice %14 {offsets = [0, 768], sizes = [8, 256], strides = [1, 1]} : vector<8x1024xf32> to vector<8x256xf32>
    %cst_20 = arith.constant 0.000000e+00 : f32
    %34 = vector.broadcast %cst_20 : f32 to vector<8x256xf32>
    %35 = arith.subf %34, %33 : vector<8x256xf32>
    %36 = math.exp %35 : vector<8x256xf32>
    %cst_21 = arith.constant 1.000000e+00 : f32
    %37 = vector.broadcast %cst_21 : f32 to vector<8x256xf32>
    %38 = arith.addf %37, %36 : vector<8x256xf32>
    %cst_22 = arith.constant 1.000000e+00 : f32
    %39 = vector.broadcast %cst_22 : f32 to vector<8x256xf32>
    %40 = arith.divf %39, %38 : vector<8x256xf32>
    %41 = arith.mulf %30, %6 : vector<8x256xf32>
    %42 = arith.mulf %22, %32 : vector<8x256xf32>
    %43 = arith.addf %41, %42 : vector<8x256xf32>
    %44 = math.tanh %43 : vector<8x256xf32>
    %45 = arith.mulf %40, %44 : vector<8x256xf32>
    %c0_23 = arith.constant 0 : index
    %c0_24 = arith.constant 0 : index
    %46 = vector.load %arg10[%c0_23, %c0_24] : memref<8x256xf32, #tpu.memory_space<vmem>>, vector<8x256xf32>
    tpu.vector_store %arg10[%c0_23, %c0_24], %45 {strides = array<i32>} : memref<8x256xf32, #tpu.memory_space<vmem>>, vector<8x256xf32>,
    %c0_25 = arith.constant 0 : index
    %c0_26 = arith.constant 0 : index
    %47 = vector.load %arg11[%c0_25, %c0_26] : memref<8x256xf32, #tpu.memory_space<vmem>>, vector<8x256xf32>
    tpu.vector_store %arg11[%c0_25, %c0_26], %43 {strides = array<i32>} : memref<8x256xf32, #tpu.memory_space<vmem>>, vector<8x256xf32>,
    %c0_27 = arith.constant 0 : index
    %c0_28 = arith.constant 0 : index
    %c0_29 = arith.constant 0 : index
    %48 = vector.load %arg7[%c0_27, %c0_28, %c0_29] : memref<1x8x256xf32, #tpu.memory_space<vmem>>, vector<1x8x256xf32>
    %49 = vector.shape_cast %48 : vector<1x8x256xf32> to vector<8x256xf32>
    %50 = vector.shape_cast %45 : vector<8x256xf32> to vector<1x8x256xf32>
    tpu.vector_store %arg7[%c0_27, %c0_28, %c0_29], %50 {strides = array<i32>} : memref<1x8x256xf32, #tpu.memory_space<vmem>>, vector<1x8x256xf32>,
    %c0_i32_30 = arith.constant 0 : i32
    %51 = arith.cmpi eq, %arg0, %c0_i32_30 : i32
    %52 = arith.extui %51 : i1 to i32
    %c0_i32_31 = arith.constant 0 : i32
    %53 = arith.cmpi ne, %52, %c0_i32_31 : i32
    scf.if %53 {
      %c0_32 = arith.constant 0 : index
      %c0_33 = arith.constant 0 : index
      %54 = vector.load %arg8[%c0_32, %c0_33] : memref<8x256xf32, #tpu.memory_space<vmem>>, vector<8x256xf32>
      tpu.vector_store %arg8[%c0_32, %c0_33], %45 {strides = array<i32>} : memref<8x256xf32, #tpu.memory_space<vmem>>, vector<8x256xf32>,
      %c0_34 = arith.constant 0 : index
      %c0_35 = arith.constant 0 : index
      %55 = vector.load %arg9[%c0_34, %c0_35] : memref<8x256xf32, #tpu.memory_space<vmem>>, vector<8x256xf32>
      tpu.vector_store %arg9[%c0_34, %c0_35], %43 {strides = array<i32>} : memref<8x256xf32, #tpu.memory_space<vmem>>, vector<8x256xf32>,
    } else {
    }
    return
  }
  func.func @transform_0(%arg0: i32) -> (i32, i32, i32) {
    %c0_i32 = arith.constant 0 : i32
    %c0_i32_0 = arith.constant 0 : i32
    %c0_i32_1 = arith.constant 0 : i32
    return %arg0, %c0_i32, %c0_i32_0 : i32, i32, i32
  }
  func.func @transform_1(%arg0: i32) -> (i32, i32) {
    %c0_i32 = arith.constant 0 : i32
    %c0_i32_0 = arith.constant 0 : i32
    %c0_i32_1 = arith.constant 0 : i32
    return %c0_i32, %c0_i32_0 : i32, i32
  }
  func.func @transform_2(%arg0: i32) -> (i32, i32) {
    %c0_i32 = arith.constant 0 : i32
    %c0_i32_0 = arith.constant 0 : i32
    %c0_i32_1 = arith.constant 0 : i32
    return %c0_i32, %c0_i32_0 : i32, i32
  }
  func.func @transform_3(%arg0: i32) -> (i32, i32) {
    %c0_i32 = arith.constant 0 : i32
    %c0_i32_0 = arith.constant 0 : i32
    %c0_i32_1 = arith.constant 0 : i32
    return %c0_i32, %c0_i32_0 : i32, i32
  }
  func.func @transform_4(%arg0: i32) -> (i32, i32) {
    %c0_i32 = arith.constant 0 : i32
    %c0_i32_0 = arith.constant 0 : i32
    %c0_i32_1 = arith.constant 0 : i32
    return %c0_i32, %c0_i32_0 : i32, i32
  }
  func.func @transform_5(%arg0: i32) -> (i32, i32) {
    %c0_i32 = arith.constant 0 : i32
    %c0_i32_0 = arith.constant 0 : i32
    %c0_i32_1 = arith.constant 0 : i32
    return %c0_i32, %c0_i32_0 : i32, i32
  }
  func.func @transform_6(%arg0: i32) -> (i32, i32, i32) {
    %c0_i32 = arith.constant 0 : i32
    %c0_i32_0 = arith.constant 0 : i32
    %c0_i32_1 = arith.constant 0 : i32
    return %arg0, %c0_i32, %c0_i32_0 : i32, i32, i32
  }
  func.func @transform_7(%arg0: i32) -> (i32, i32) {
    %c0_i32 = arith.constant 0 : i32
    %c0_i32_0 = arith.constant 0 : i32
    %c0_i32_1 = arith.constant 0 : i32
    return %c0_i32, %c0_i32_0 : i32, i32
  }
  func.func @transform_8(%arg0: i32) -> (i32, i32) {
    %c0_i32 = arith.constant 0 : i32
    %c0_i32_0 = arith.constant 0 : i32
    %c0_i32_1 = arith.constant 0 : i32
    return %c0_i32, %c0_i32_0 : i32, i32
  }
}

</mosaic_0001>

<llo_original>
// kernel: _memory_forward_impl.1
$region0: #{_memory_forward_impl.1}
  #allocation0 [shape = 'u32[]', space=smem, size = 0x4, offset = 0x4, fixed_abs, tag = 'smem constant byte address 0x4 - core index']
  #allocation1 [shape = 'u32[144,128]{1,0:T(1,128)}', space=vmem, size = 0x12000, scoped, tag = 'internal scratch']
  #allocation2 [shape = 'f32[8,256]{1,0:T(8,128)}', space=vmem, size = 0x2000, scoped, tag = 'scratch operand']
  #allocation3 [shape = 'f32[8,256]{1,0:T(8,128)}', space=vmem, size = 0x2000, scoped, tag = 'scratch operand']
  %s0 = inlined_call_operand.vmem [shape: f32[1,8,48], index: 0, kind: input, shape index: {}]
  %s1 = inlined_call_operand.vmem [shape: f32[8,256], index: 1, kind: input, shape index: {}]
  %s2 = inlined_call_operand.vmem [shape: f32[8,256], index: 2, kind: input, shape index: {}]
  %s3 = inlined_call_operand.hbm [shape: f32[48,1024], index: 3, kind: input, shape index: {}]
  %s4 = inlined_call_operand.hbm [shape: f32[256,1024], index: 4, kind: input, shape index: {}]
  %s5 = inlined_call_operand.vmem [shape: f32[1,1024], index: 5, kind: input, shape index: {}]
  %s6 = inlined_call_operand.vmem [shape: f32[1,8,256], index: 6, kind: output, shape index: {0}]
  %s7 = inlined_call_operand.vmem [shape: f32[8,256], index: 7, kind: output, shape index: {1}]
  %s8 = inlined_call_operand.vmem [shape: f32[8,256], index: 8, kind: output, shape index: {2}]
  %9 = xla_tuple %s6, %s7, %s8
  %s10 = sld [smem:[#allocation0]]
  $region66: #{_memory_forward_impl.1} parent=0
    _
  %s12 = ssub.s32 1, %s10
  %s13 = scalar_select 0, %s12, %s10
  $region1: #{_memory_forward_impl.1} parent=0
    #allocation4 [shape = 'u8[196608]{0}', space=vmem, size = 0x30000, scoped, tag = 'input window, operand 3, single buffered']
    #allocation5 [shape = 's32[1]{0}', space=sflag, size = 0x4, scoped, tag = 'scoped memory for _memory_forward_impl.1']
    #allocation6 [shape = 'u8[1048576]{0}', space=vmem, size = 0x100000, scoped, tag = 'input window, operand 4, single buffered']
    #allocation7 [shape = 's32[1]{0}', space=sflag, size = 0x4, scoped, tag = 'scoped memory for _memory_forward_impl.1']
    %14 = vsyncpa [#allocation5], 0
    %15 = vsyncpa [#allocation7], 0
    // Predicated region
    $region2: #{_memory_forward_impl.1} parent=1 // pred_check
      _
    $region3: #{_memory_forward_impl.1} parent=1 // pred_check_branch
      %17 = sbr.rel (0) target = $region5
    $region4: #{_memory_forward_impl.1} parent=1 // pred_region
      _
    $region5: #{_memory_forward_impl.1} parent=1 // pred_fallthru
      _
    // Predicated region
    $region6: #{_memory_forward_impl.1} parent=1 // pred_check
      _
    $region7: #{_memory_forward_impl.1} parent=1 // pred_check_branch
      %19 = sbr.rel (0) target = $region9
    $region8: #{_memory_forward_impl.1} parent=1 // pred_region
      _
    $region9: #{_memory_forward_impl.1} parent=1 // pred_fallthru
      _
    // Predicated region
    $region10: #{_memory_forward_impl.1} parent=1 // pred_check
      _
    $region11: #{_memory_forward_impl.1} parent=1 // pred_check_branch
      %21 = sbr.rel (0) target = $region13
    $region12: #{_memory_forward_impl.1} parent=1 // pred_region
      _
    $region13: #{_memory_forward_impl.1} parent=1 // pred_fallthru
      _
    // Predicated region
    $region14: #{_memory_forward_impl.1} parent=1 // pred_check
      _
    $region15: #{_memory_forward_impl.1} parent=1 // pred_check_branch
      %23 = sbr.rel (0) target = $region17
    $region16: #{_memory_forward_impl.1} parent=1 // pred_region
      %s25 = ssub.s32 6144, 6144
      %26 = vsyncadd [#allocation5], %s25
      %s27 = sshll.u32 [#allocation4], 4
      %s28 = int_to_ptr.vmem [resolvable:$true] %s27
      %33 = dma.hbm_to_vmem [thread:$0]  %s3, 6144, %s28, [#allocation5], 1024, 1024, 64
    $region17: #{_memory_forward_impl.1} parent=1 // pred_fallthru
      _
    // Predicated region
    $region18: #{_memory_forward_impl.1} parent=1 // pred_check
      _
    $region19: #{_memory_forward_impl.1} parent=1 // pred_check_branch
      %35 = sbr.rel (0) target = $region21
    $region20: #{_memory_forward_impl.1} parent=1 // pred_region
      %s37 = ssub.s32 32768, 32768
      %38 = vsyncadd [#allocation7], %s37
      %s39 = sshll.u32 [#allocation6], 4
      %s40 = int_to_ptr.vmem [resolvable:$true] %s39
      %45 = dma.hbm_to_vmem [thread:$0]  %s4, 32768, %s40, [#allocation7], 1024, 1024, 64
    $region21: #{_memory_forward_impl.1} parent=1 // pred_fallthru
      _
    // Predicated region
    $region22: #{_memory_forward_impl.1} parent=1 // pred_check
      _
    $region23: #{_memory_forward_impl.1} parent=1 // pred_check_branch
      %47 = sbr.rel (0) target = $region25
    $region24: #{_memory_forward_impl.1} parent=1 // pred_region
      _
    $region25: #{_memory_forward_impl.1} parent=1 // pred_fallthru
      _
    // Predicated region
    $region26: #{_memory_forward_impl.1} parent=1 // pred_check
      _
    $region27: #{_memory_forward_impl.1} parent=1 // pred_check_branch
      %49 = sbr.rel (0) target = $region29
    $region28: #{_memory_forward_impl.1} parent=1 // pred_region
      %50 = dma.done [#allocation5], 6144
    $region29: #{_memory_forward_impl.1} parent=1 // pred_fallthru
      _
    // Predicated region
    $region30: #{_memory_forward_impl.1} parent=1 // pred_check
      _
    $region31: #{_memory_forward_impl.1} parent=1 // pred_check_branch
      %52 = sbr.rel (0) target = $region33
    $region32: #{_memory_forward_impl.1} parent=1 // pred_region
      %53 = dma.done [#allocation7], 32768
    $region33: #{_memory_forward_impl.1} parent=1 // pred_fallthru
      _
    %p54 = scmp.eq.s32.totalorder 0, 0
    // Predicated region
    $region34: #{_memory_forward_impl.1} parent=1 // pred_check
      %p55 = pneg %p54
    $region35: #{_memory_forward_impl.1} parent=1 // pred_check_branch
      %57 = sbr.rel (%p55) target = $region37
    $region36: #{_memory_forward_impl.1} parent=1 // pred_region
      %v58 = vld [vmem:[%s1] sm:$0xff]
      %v59 = vld [vmem:[%s1 + $0x8] sm:$0xff]
      %60 = vst [vmem:[#allocation2] sm:$0xff] %v58
      %61 = vst [vmem:[#allocation2 + $0x8] sm:$0xff] %v59
      %v62 = vld [vmem:[%s2] sm:$0xff]
      %v63 = vld [vmem:[%s2 + $0x8] sm:$0xff]
      %64 = vst [vmem:[#allocation3] sm:$0xff] %v62
      %65 = vst [vmem:[#allocation3 + $0x8] sm:$0xff] %v63
    $region37: #{_memory_forward_impl.1} parent=1 // pred_fallthru
      _
    %v66 = vld [vmem:[%s0] sm:$0xff]
    %v67 = vld [vmem:[#allocation2] sm:$0xff]
    %v68 = vld [vmem:[#allocation2 + $0x8] sm:$0xff]
    %v69 = vld [vmem:[#allocation3] sm:$0xff]
    %v70 = vld [vmem:[#allocation3 + $0x8] sm:$0xff]
    %v71 = vld [vmem:[#allocation4] sm:$0xff]
    %v72 = vld [vmem:[#allocation4 + $0x8] sm:$0xff]
    %v73 = vld [vmem:[#allocation4 + $0x10] sm:$0xff]
    %v74 = vld [vmem:[#allocation4 + $0x18] sm:$0xff]
    %v75 = vld [vmem:[#allocation4 + $0x20] sm:$0xff]
    %v76 = vld [vmem:[#allocation4 + $0x28] sm:$0xff]
    %v77 = vld [vmem:[#allocation4 + $0x30] sm:$0xff]
    %v78 = vld [vmem:[#allocation4 + $0x38] sm:$0xff]
    %v79 = vld [vmem:[#allocation4 + $0x40] sm:$0xff]
    %v80 = vld [vmem:[#allocation4 + $0x48] sm:$0xff]
    %v81 = vld [vmem:[#allocation4 + $0x50] sm:$0xff]
    %v82 = vld [vmem:[#allocation4 + $0x58] sm:$0xff]
    %v83 = vld [vmem:[#allocation4 + $0x60] sm:$0xff]
    %v84 = vld [vmem:[#allocation4 + $0x68] sm:$0xff]
    %v85 = vld [vmem:[#allocation4 + $0x70] sm:$0xff]
    %v86 = vld [vmem:[#allocation4 + $0x78] sm:$0xff]
    %v87 = vld [vmem:[#allocation4 + $0x80] sm:$0xff]
    %v88 = vld [vmem:[#allocation4 + $0x88] sm:$0xff]
    %v89 = vld [vmem:[#allocation4 + $0x90] sm:$0xff]
    %v90 = vld [vmem:[#allocation4 + $0x98] sm:$0xff]
    %v91 = vld [vmem:[#allocation4 + $0xa0] sm:$0xff]
    %v92 = vld [vmem:[#allocation4 + $0xa8] sm:$0xff]
    %v93 = vld [vmem:[#allocation4 + $0xb0] sm:$0xff]
    %v94 = vld [vmem:[#allocation4 + $0xb8] sm:$0xff]
    %v95 = vld [vmem:[#allocation4 + $0xc0] sm:$0xff]
    %v96 = vld [vmem:[#allocation4 + $0xc8] sm:$0xff]
    %v97 = vld [vmem:[#allocation4 + $0xd0] sm:$0xff]
    %v98 = vld [vmem:[#allocation4 + $0xd8] sm:$0xff]
    %v99 = vld [vmem:[#allocation4 + $0xe0] sm:$0xff]
    %v100 = vld [vmem:[#allocation4 + $0xe8] sm:$0xff]
    %v101 = vld [vmem:[#allocation4 + $0xf0] sm:$0xff]
    %v102 = vld [vmem:[#allocation4 + $0xf8] sm:$0xff]
    %v103 = vld [vmem:[#allocation4 + $0x100] sm:$0xff]
    %v104 = vld [vmem:[#allocation4 + $0x108] sm:$0xff]
    %v105 = vld [vmem:[#allocation4 + $0x110] sm:$0xff]
    %v106 = vld [vmem:[#allocation4 + $0x118] sm:$0xff]
    %v107 = vld [vmem:[#allocation4 + $0x120] sm:$0xff]
    %v108 = vld [vmem:[#allocation4 + $0x128] sm:$0xff]
    %v109 = vld [vmem:[#allocation4 + $0x130] sm:$0xff]
    %v110 = vld [vmem:[#allocation4 + $0x138] sm:$0xff]
    %v111 = vld [vmem:[#allocation4 + $0x140] sm:$0xff]
    %v112 = vld [vmem:[#allocation4 + $0x148] sm:$0xff]
    %v113 = vld [vmem:[#allocation4 + $0x150] sm:$0xff]
    %v114 = vld [vmem:[#allocation4 + $0x158] sm:$0xff]
    %v115 = vld [vmem:[#allocation4 + $0x160] sm:$0xff]
    %v116 = vld [vmem:[#allocation4 + $0x168] sm:$0xff]
    %v117 = vld [vmem:[#allocation4 + $0x170] sm:$0xff]
    %v118 = vld [vmem:[#allocation4 + $0x178] sm:$0xff]
    %v119 = vld [vmem:[#allocation6] sm:$0xff]
    %v120 = vld [vmem:[#allocation6 + $0x8] sm:$0xff]
    %v121 = vld [vmem:[#allocation6 + $0x10] sm:$0xff]
    %v122 = vld [vmem:[#allocation6 + $0x18] sm:$0xff]
    %v123 = vld [vmem:[#allocation6 + $0x20] sm:$0xff]
    %v124 = vld [vmem:[#allocation6 + $0x28] sm:$0xff]
    %v125 = vld [vmem:[#allocation6 + $0x30] sm:$0xff]
    %v126 = vld [vmem:[#allocation6 + $0x38] sm:$0xff]
    %v127 = vld [vmem:[#allocation6 + $0x40] sm:$0xff]
    %v128 = vld [vmem:[#allocation6 + $0x48] sm:$0xff]
    %v129 = vld [vmem:[#allocation6 + $0x50] sm:$0xff]
    %v130 = vld [vmem:[#allocation6 + $0x58] sm:$0xff]
    %v131 = vld [vmem:[#allocation6 + $0x60] sm:$0xff]
    %v132 = vld [vmem:[#allocation6 + $0x68] sm:$0xff]
    %v133 = vld [vmem:[#allocation6 + $0x70] sm:$0xff]
    %v134 = vld [vmem:[#allocation6 + $0x78] sm:$0xff]
    %v135 = vld [vmem:[#allocation6 + $0x80] sm:$0xff]
    %v136 = vld [vmem:[#allocation6 + $0x88] sm:$0xff]
    %v137 = vld [vmem:[#allocation6 + $0x90] sm:$0xff]
    %v138 = vld [vmem:[#allocation6 + $0x98] sm:$0xff]
    %v139 = vld [vmem:[#allocation6 + $0xa0] sm:$0xff]
    %v140 = vld [vmem:[#allocation6 + $0xa8] sm:$0xff]
    %v141 = vld [vmem:[#allocation6 + $0xb0] sm:$0xff]
    %v142 = vld [vmem:[#allocation6 + $0xb8] sm:$0xff]
    %v143 = vld [vmem:[#allocation6 + $0xc0] sm:$0xff]
    %v144 = vld [vmem:[#allocation6 + $0xc8] sm:$0xff]
    %v145 = vld [vmem:[#allocation6 + $0xd0] sm:$0xff]
    %v146 = vld [vmem:[#allocation6 + $0xd8] sm:$0xff]
    %v147 = vld [vmem:[#allocation6 + $0xe0] sm:$0xff]
    %v148 = vld [vmem:[#allocation6 + $0xe8] sm:$0xff]
    %v149 = vld [vmem:[#allocation6 + $0xf0] sm:$0xff]
    %v150 = vld [vmem:[#allocation6 + $0xf8] sm:$0xff]
    %v151 = vld [vmem:[#allocation6 + $0x100] sm:$0xff]
    %v152 = vld [vmem:[#allocation6 + $0x108] sm:$0xff]
    %v153 = vld [vmem:[#allocation6 + $0x110] sm:$0xff]
    %v154 = vld [vmem:[#allocation6 + $0x118] sm:$0xff]
    %v155 = vld [vmem:[#allocation6 + $0x120] sm:$0xff]
    %v156 = vld [vmem:[#allocation6 + $0x128] sm:$0xff]
    %v157 = vld [vmem:[#allocation6 + $0x130] sm:$0xff]
    %v158 = vld [vmem:[#allocation6 + $0x138] sm:$0xff]
    %v159 = vld [vmem:[#allocation6 + $0x140] sm:$0xff]
    %v160 = vld [vmem:[#allocation6 + $0x148] sm:$0xff]
    %v161 = vld [vmem:[#allocation6 + $0x150] sm:$0xff]
    %v162 = vld [vmem:[#allocation6 + $0x158] sm:$0xff]
    %v163 = vld [vmem:[#allocation6 + $0x160] sm:$0xff]
    %v164 = vld [vmem:[#allocation6 + $0x168] sm:$0xff]
    %v165 = vld [vmem:[#allocation6 + $0x170] sm:$0xff]
    %v166 = vld [vmem:[#allocation6 + $0x178] sm:$0xff]
    %v167 = vld [vmem:[#allocation6 + $0x180] sm:$0xff]
    %v168 = vld [vmem:[#allocation6 + $0x188] sm:$0xff]
    %v169 = vld [vmem:[#allocation6 + $0x190] sm:$0xff]
    %v170 = vld [vmem:[#allocation6 + $0x198] sm:$0xff]
    %v171 = vld [vmem:[#allocation6 + $0x1a0] sm:$0xff]
    %v172 = vld [vmem:[#allocation6 + $0x1a8] sm:$0xff]
    %v173 = vld [vmem:[#allocation6 + $0x1b0] sm:$0xff]
    %v174 = vld [vmem:[#allocation6 + $0x1b8] sm:$0xff]
    %v175 = vld [vmem:[#allocation6 + $0x1c0] sm:$0xff]
    %v176 = vld [vmem:[#allocation6 + $0x1c8] sm:$0xff]
    %v177 = vld [vmem:[#allocation6 + $0x1d0] sm:$0xff]
    %v178 = vld [vmem:[#allocation6 + $0x1d8] sm:$0xff]
    %v179 = vld [vmem:[#allocation6 + $0x1e0] sm:$0xff]
    %v180 = vld [vmem:[#allocation6 + $0x1e8] sm:$0xff]
    %v181 = vld [vmem:[#allocation6 + $0x1f0] sm:$0xff]
    %v182 = vld [vmem:[#allocation6 + $0x1f8] sm:$0xff]
    %v183 = vld [vmem:[#allocation6 + $0x200] sm:$0xff]
    %v184 = vld [vmem:[#allocation6 + $0x208] sm:$0xff]
    %v185 = vld [vmem:[#allocation6 + $0x210] sm:$0xff]
    %v186 = vld [vmem:[#allocation6 + $0x218] sm:$0xff]
    %v187 = vld [vmem:[#allocation6 + $0x220] sm:$0xff]
    %v188 = vld [vmem:[#allocation6 + $0x228] sm:$0xff]
    %v189 = vld [vmem:[#allocation6 + $0x230] sm:$0xff]
    %v190 = vld [vmem:[#allocation6 + $0x238] sm:$0xff]
    %v191 = vld [vmem:[#allocation6 + $0x240] sm:$0xff]
    %v192 = vld [vmem:[#allocation6 + $0x248] sm:$0xff]
    %v193 = vld [vmem:[#allocation6 + $0x250] sm:$0xff]
    %v194 = vld [vmem:[#allocation6 + $0x258] sm:$0xff]
    %v195 = vld [vmem:[#allocation6 + $0x260] sm:$0xff]
    %v196 = vld [vmem:[#allocation6 + $0x268] sm:$0xff]
    %v197 = vld [vmem:[#allocation6 + $0x270] sm:$0xff]
    %v198 = vld [vmem:[#allocation6 + $0x278] sm:$0xff]
    %v199 = vld [vmem:[#allocation6 + $0x280] sm:$0xff]
    %v200 = vld [vmem:[#allocation6 + $0x288] sm:$0xff]
    %v201 = vld [vmem:[#allocation6 + $0x290] sm:$0xff]
    %v202 = vld [vmem:[#allocation6 + $0x298] sm:$0xff]
    %v203 = vld [vmem:[#allocation6 + $0x2a0] sm:$0xff]
    %v204 = vld [vmem:[#allocation6 + $0x2a8] sm:$0xff]
    %v205 = vld [vmem:[#allocation6 + $0x2b0] sm:$0xff]
    %v206 = vld [vmem:[#allocation6 + $0x2b8] sm:$0xff]
    %v207 = vld [vmem:[#allocation6 + $0x2c0] sm:$0xff]
    %v208 = vld [vmem:[#allocation6 + $0x2c8] sm:$0xff]
    %v209 = vld [vmem:[#allocation6 + $0x2d0] sm:$0xff]
    %v210 = vld [vmem:[#allocation6 + $0x2d8] sm:$0xff]
    %v211 = vld [vmem:[#allocation6 + $0x2e0] sm:$0xff]
    %v212 = vld [vmem:[#allocation6 + $0x2e8] sm:$0xff]
    %v213 = vld [vmem:[#allocation6 + $0x2f0] sm:$0xff]
    %v214 = vld [vmem:[#allocation6 + $0x2f8] sm:$0xff]
    %v215 = vld [vmem:[#allocation6 + $0x300] sm:$0xff]
    %v216 = vld [vmem:[#allocation6 + $0x308] sm:$0xff]
    %v217 = vld [vmem:[#allocation6 + $0x310] sm:$0xff]
    %v218 = vld [vmem:[#allocation6 + $0x318] sm:$0xff]
    %v219 = vld [vmem:[#allocation6 + $0x320] sm:$0xff]
    %v220 = vld [vmem:[#allocation6 + $0x328] sm:$0xff]
    %v221 = vld [vmem:[#allocation6 + $0x330] sm:$0xff]
    %v222 = vld [vmem:[#allocation6 + $0x338] sm:$0xff]
    %v223 = vld [vmem:[#allocation6 + $0x340] sm:$0xff]
    %v224 = vld [vmem:[#allocation6 + $0x348] sm:$0xff]
    %v225 = vld [vmem:[#allocation6 + $0x350] sm:$0xff]
    %v226 = vld [vmem:[#allocation6 + $0x358] sm:$0xff]
    %v227 = vld [vmem:[#allocation6 + $0x360] sm:$0xff]
    %v228 = vld [vmem:[#allocation6 + $0x368] sm:$0xff]
    %v229 = vld [vmem:[#allocation6 + $0x370] sm:$0xff]
    %v230 = vld [vmem:[#allocation6 + $0x378] sm:$0xff]
    %v231 = vld [vmem:[#allocation6 + $0x380] sm:$0xff]
    %v232 = vld [vmem:[#allocation6 + $0x388] sm:$0xff]
    %v233 = vld [vmem:[#allocation6 + $0x390] sm:$0xff]
    %v234 = vld [vmem:[#allocation6 + $0x398] sm:$0xff]
    %v235 = vld [vmem:[#allocation6 + $0x3a0] sm:$0xff]
    %v236 = vld [vmem:[#allocation6 + $0x3a8] sm:$0xff]
    %v237 = vld [vmem:[#allocation6 + $0x3b0] sm:$0xff]
    %v238 = vld [vmem:[#allocation6 + $0x3b8] sm:$0xff]
    %v239 = vld [vmem:[#allocation6 + $0x3c0] sm:$0xff]
    %v240 = vld [vmem:[#allocation6 + $0x3c8] sm:$0xff]
    %v241 = vld [vmem:[#allocation6 + $0x3d0] sm:$0xff]
    %v242 = vld [vmem:[#allocation6 + $0x3d8] sm:$0xff]
    %v243 = vld [vmem:[#allocation6 + $0x3e0] sm:$0xff]
    %v244 = vld [vmem:[#allocation6 + $0x3e8] sm:$0xff]
    %v245 = vld [vmem:[#allocation6 + $0x3f0] sm:$0xff]
    %v246 = vld [vmem:[#allocation6 + $0x3f8] sm:$0xff]
    %v247 = vld [vmem:[#allocation6 + $0x400] sm:$0xff]
    %v248 = vld [vmem:[#allocation6 + $0x408] sm:$0xff]
    %v249 = vld [vmem:[#allocation6 + $0x410] sm:$0xff]
    %v250 = vld [vmem:[#allocation6 + $0x418] sm:$0xff]
    %v251 = vld [vmem:[#allocation6 + $0x420] sm:$0xff]
    %v252 = vld [vmem:[#allocation6 + $0x428] sm:$0xff]
    %v253 = vld [vmem:[#allocation6 + $0x430] sm:$0xff]
    %v254 = vld [vmem:[#allocation6 + $0x438] sm:$0xff]
    %v255 = vld [vmem:[#allocation6 + $0x440] sm:$0xff]
    %v256 = vld [vmem:[#allocation6 + $0x448] sm:$0xff]
    %v257 = vld [vmem:[#allocation6 + $0x450] sm:$0xff]
    %v258 = vld [vmem:[#allocation6 + $0x458] sm:$0xff]
    %v259 = vld [vmem:[#allocation6 + $0x460] sm:$0xff]
    %v260 = vld [vmem:[#allocation6 + $0x468] sm:$0xff]
    %v261 = vld [vmem:[#allocation6 + $0x470] sm:$0xff]
    %v262 = vld [vmem:[#allocation6 + $0x478] sm:$0xff]
    %v263 = vld [vmem:[#allocation6 + $0x480] sm:$0xff]
    %v264 = vld [vmem:[#allocation6 + $0x488] sm:$0xff]
    %v265 = vld [vmem:[#allocation6 + $0x490] sm:$0xff]
    %v266 = vld [vmem:[#allocation6 + $0x498] sm:$0xff]
    %v267 = vld [vmem:[#allocation6 + $0x4a0] sm:$0xff]
    %v268 = vld [vmem:[#allocation6 + $0x4a8] sm:$0xff]
    %v269 = vld [vmem:[#allocation6 + $0x4b0] sm:$0xff]
    %v270 = vld [vmem:[#allocation6 + $0x4b8] sm:$0xff]
    %v271 = vld [vmem:[#allocation6 + $0x4c0] sm:$0xff]
    %v272 = vld [vmem:[#allocation6 + $0x4c8] sm:$0xff]
    %v273 = vld [vmem:[#allocation6 + $0x4d0] sm:$0xff]
    %v274 = vld [vmem:[#allocation6 + $0x4d8] sm:$0xff]
    %v275 = vld [vmem:[#allocation6 + $0x4e0] sm:$0xff]
    %v276 = vld [vmem:[#allocation6 + $0x4e8] sm:$0xff]
    %v277 = vld [vmem:[#allocation6 + $0x4f0] sm:$0xff]
    %v278 = vld [vmem:[#allocation6 + $0x4f8] sm:$0xff]
    %v279 = vld [vmem:[#allocation6 + $0x500] sm:$0xff]
    %v280 = vld [vmem:[#allocation6 + $0x508] sm:$0xff]
    %v281 = vld [vmem:[#allocation6 + $0x510] sm:$0xff]
    %v282 = vld [vmem:[#allocation6 + $0x518] sm:$0xff]
    %v283 = vld [vmem:[#allocation6 + $0x520] sm:$0xff]
    %v284 = vld [vmem:[#allocation6 + $0x528] sm:$0xff]
    %v285 = vld [vmem:[#allocation6 + $0x530] sm:$0xff]
    %v286 = vld [vmem:[#allocation6 + $0x538] sm:$0xff]
    %v287 = vld [vmem:[#allocation6 + $0x540] sm:$0xff]
    %v288 = vld [vmem:[#allocation6 + $0x548] sm:$0xff]
    %v289 = vld [vmem:[#allocation6 + $0x550] sm:$0xff]
    %v290 = vld [vmem:[#allocation6 + $0x558] sm:$0xff]
    %v291 = vld [vmem:[#allocation6 + $0x560] sm:$0xff]
    %v292 = vld [vmem:[#allocation6 + $0x568] sm:$0xff]
    %v293 = vld [vmem:[#allocation6 + $0x570] sm:$0xff]
    %v294 = vld [vmem:[#allocation6 + $0x578] sm:$0xff]
    %v295 = vld [vmem:[#allocation6 + $0x580] sm:$0xff]
    %v296 = vld [vmem:[#allocation6 + $0x588] sm:$0xff]
    %v297 = vld [vmem:[#allocation6 + $0x590] sm:$0xff]
    %v298 = vld [vmem:[#allocation6 + $0x598] sm:$0xff]
    %v299 = vld [vmem:[#allocation6 + $0x5a0] sm:$0xff]
    %v300 = vld [vmem:[#allocation6 + $0x5a8] sm:$0xff]
    %v301 = vld [vmem:[#allocation6 + $0x5b0] sm:$0xff]
    %v302 = vld [vmem:[#allocation6 + $0x5b8] sm:$0xff]
    %v303 = vld [vmem:[#allocation6 + $0x5c0] sm:$0xff]
    %v304 = vld [vmem:[#allocation6 + $0x5c8] sm:$0xff]
    %v305 = vld [vmem:[#allocation6 + $0x5d0] sm:$0xff]
    %v306 = vld [vmem:[#allocation6 + $0x5d8] sm:$0xff]
    %v307 = vld [vmem:[#allocation6 + $0x5e0] sm:$0xff]
    %v308 = vld [vmem:[#allocation6 + $0x5e8] sm:$0xff]
    %v309 = vld [vmem:[#allocation6 + $0x5f0] sm:$0xff]
    %v310 = vld [vmem:[#allocation6 + $0x5f8] sm:$0xff]
    %v311 = vld [vmem:[#allocation6 + $0x600] sm:$0xff]
    %v312 = vld [vmem:[#allocation6 + $0x608] sm:$0xff]
    %v313 = vld [vmem:[#allocation6 + $0x610] sm:$0xff]
    %v314 = vld [vmem:[#allocation6 + $0x618] sm:$0xff]
    %v315 = vld [vmem:[#allocation6 + $0x620] sm:$0xff]
    %v316 = vld [vmem:[#allocation6 + $0x628] sm:$0xff]
    %v317 = vld [vmem:[#allocation6 + $0x630] sm:$0xff]
    %v318 = vld [vmem:[#allocation6 + $0x638] sm:$0xff]
    %v319 = vld [vmem:[#allocation6 + $0x640] sm:$0xff]
    %v320 = vld [vmem:[#allocation6 + $0x648] sm:$0xff]
    %v321 = vld [vmem:[#allocation6 + $0x650] sm:$0xff]
    %v322 = vld [vmem:[#allocation6 + $0x658] sm:$0xff]
    %v323 = vld [vmem:[#allocation6 + $0x660] sm:$0xff]
    %v324 = vld [vmem:[#allocation6 + $0x668] sm:$0xff]
    %v325 = vld [vmem:[#allocation6 + $0x670] sm:$0xff]
    %v326 = vld [vmem:[#allocation6 + $0x678] sm:$0xff]
    %v327 = vld [vmem:[#allocation6 + $0x680] sm:$0xff]
    %v328 = vld [vmem:[#allocation6 + $0x688] sm:$0xff]
    %v329 = vld [vmem:[#allocation6 + $0x690] sm:$0xff]
    %v330 = vld [vmem:[#allocation6 + $0x698] sm:$0xff]
    %v331 = vld [vmem:[#allocation6 + $0x6a0] sm:$0xff]
    %v332 = vld [vmem:[#allocation6 + $0x6a8] sm:$0xff]
    %v333 = vld [vmem:[#allocation6 + $0x6b0] sm:$0xff]
    %v334 = vld [vmem:[#allocation6 + $0x6b8] sm:$0xff]
    %v335 = vld [vmem:[#allocation6 + $0x6c0] sm:$0xff]
    %v336 = vld [vmem:[#allocation6 + $0x6c8] sm:$0xff]
    %v337 = vld [vmem:[#allocation6 + $0x6d0] sm:$0xff]
    %v338 = vld [vmem:[#allocation6 + $0x6d8] sm:$0xff]
    %v339 = vld [vmem:[#allocation6 + $0x6e0] sm:$0xff]
    %v340 = vld [vmem:[#allocation6 + $0x6e8] sm:$0xff]
    %v341 = vld [vmem:[#allocation6 + $0x6f0] sm:$0xff]
    %v342 = vld [vmem:[#allocation6 + $0x6f8] sm:$0xff]
    %v343 = vld [vmem:[#allocation6 + $0x700] sm:$0xff]
    %v344 = vld [vmem:[#allocation6 + $0x708] sm:$0xff]
    %v345 = vld [vmem:[#allocation6 + $0x710] sm:$0xff]
    %v346 = vld [vmem:[#allocation6 + $0x718] sm:$0xff]
    %v347 = vld [vmem:[#allocation6 + $0x720] sm:$0xff]
    %v348 = vld [vmem:[#allocation6 + $0x728] sm:$0xff]
    %v349 = vld [vmem:[#allocation6 + $0x730] sm:$0xff]
    %v350 = vld [vmem:[#allocation6 + $0x738] sm:$0xff]
    %v351 = vld [vmem:[#allocation6 + $0x740] sm:$0xff]
    %v352 = vld [vmem:[#allocation6 + $0x748] sm:$0xff]
    %v353 = vld [vmem:[#allocation6 + $0x750] sm:$0xff]
    %v354 = vld [vmem:[#allocation6 + $0x758] sm:$0xff]
    %v355 = vld [vmem:[#allocation6 + $0x760] sm:$0xff]
    %v356 = vld [vmem:[#allocation6 + $0x768] sm:$0xff]
    %v357 = vld [vmem:[#allocation6 + $0x770] sm:$0xff]
    %v358 = vld [vmem:[#allocation6 + $0x778] sm:$0xff]
    %v359 = vld [vmem:[#allocation6 + $0x780] sm:$0xff]
    %v360 = vld [vmem:[#allocation6 + $0x788] sm:$0xff]
    %v361 = vld [vmem:[#allocation6 + $0x790] sm:$0xff]
    %v362 = vld [vmem:[#allocation6 + $0x798] sm:$0xff]
    %v363 = vld [vmem:[#allocation6 + $0x7a0] sm:$0xff]
    %v364 = vld [vmem:[#allocation6 + $0x7a8] sm:$0xff]
    %v365 = vld [vmem:[#allocation6 + $0x7b0] sm:$0xff]
    %v366 = vld [vmem:[#allocation6 + $0x7b8] sm:$0xff]
    %v367 = vld [vmem:[#allocation6 + $0x7c0] sm:$0xff]
    %v368 = vld [vmem:[#allocation6 + $0x7c8] sm:$0xff]
    %v369 = vld [vmem:[#allocation6 + $0x7d0] sm:$0xff]
    %v370 = vld [vmem:[#allocation6 + $0x7d8] sm:$0xff]
    %v371 = vld [vmem:[#allocation6 + $0x7e0] sm:$0xff]
    %v372 = vld [vmem:[#allocation6 + $0x7e8] sm:$0xff]
    %v373 = vld [vmem:[#allocation6 + $0x7f0] sm:$0xff]
    %v374 = vld [vmem:[#allocation6 + $0x7f8] sm:$0xff]
    %375 = vmatprep.subr.mxu0 %v120
    %376 = vmatpush1.msra.mxu0 %v119
    %377 = vmatprep.subr.mxu0 %v128
    %378 = vmatpush1.msra.mxu0 %v127
    %379 = vmatprep.subr.mxu0 %v136
    %380 = vmatpush1.msra.mxu0 %v135
    %381 = vmatprep.subr.mxu0 %v144
    %382 = vmatpush1.msra.mxu0 %v143
    %383 = vmatprep.subr.mxu0 %v152
    %384 = vmatpush1.msra.mxu0 %v151
    %385 = vmatprep.subr.mxu0 %v160
    %386 = vmatpush1.msra.mxu0 %v159
    %387 = vmatprep.subr.mxu0 %v168
    %388 = vmatpush1.msra.mxu0 %v167
    %389 = vmatprep.subr.mxu0 %v176
    %390 = vmatpush1.msra.mxu0 %v175
    %391 = vmatprep.subr.mxu0 %v184
    %392 = vmatpush1.msra.mxu0 %v183
    %393 = vmatprep.subr.mxu0 %v192
    %394 = vmatpush1.msra.mxu0 %v191
    %395 = vmatprep.subr.mxu0 %v200
    %396 = vmatpush1.msra.mxu0 %v199
    %397 = vmatprep.subr.mxu0 %v208
    %398 = vmatpush1.msra.mxu0 %v207
    %399 = vmatprep.subr.mxu0 %v216
    %400 = vmatpush1.msra.mxu0 %v215
    %401 = vmatprep.subr.mxu0 %v224
    %402 = vmatpush1.msra.mxu0 %v223
    %403 = vmatprep.subr.mxu0 %v232
    %404 = vmatpush1.msra.mxu0 %v231
    %405 = vmatprep.subr.mxu0 %v240
    %406 = vmatpush1.msra.mxu0 %v239
    %407 = vmatprep.subr.mxu0 %v248
    %408 = vmatpush1.msra.mxu0 %v247
    %409 = vmatprep.subr.mxu0 %v256
    %410 = vmatpush1.msra.mxu0 %v255
    %411 = vmatprep.subr.mxu0 %v264
    %412 = vmatpush1.msra.mxu0 %v263
    %413 = vmatprep.subr.mxu0 %v272
    %414 = vmatpush1.msra.mxu0 %v271
    %415 = vmatprep.subr.mxu0 %v280
    %416 = vmatpush1.msra.mxu0 %v279
    %417 = vmatprep.subr.mxu0 %v288
    %418 = vmatpush1.msra.mxu0 %v287
    %419 = vmatprep.subr.mxu0 %v296
    %420 = vmatpush1.msra.mxu0 %v295
    %421 = vmatprep.subr.mxu0 %v304
    %422 = vmatpush1.msra.mxu0 %v303
    %423 = vmatprep.subr.mxu0 %v312
    %424 = vmatpush1.msra.mxu0 %v311
    %425 = vmatprep.subr.mxu0 %v320
    %426 = vmatpush1.msra.mxu0 %v319
    %427 = vmatprep.subr.mxu0 %v328
    %428 = vmatpush1.msra.mxu0 %v327
    %429 = vmatprep.subr.mxu0 %v336
    %430 = vmatpush1.msra.mxu0 %v335
    %431 = vmatprep.subr.mxu0 %v344
    %432 = vmatpush1.msra.mxu0 %v343
    %433 = vmatprep.subr.mxu0 %v352
    %434 = vmatpush1.msra.mxu0 %v351
    %435 = vmatprep.subr.mxu0 %v360
    %436 = vmatpush1.msra.mxu0 %v359
    %437 = vmatprep.subr.mxu0 %v368
    %438 = vmatpush1.msra.mxu0 %v367
    %439 = vmatprep.mubr.f32.mxu0 %v68
    %440 = vmatmul.mubr.f32.gmra.mrb[0].mxu0 %v67
    %v441 = vpop.f32.mrb[0].mxu0
    %v442 = vadd.f32 0.0, %v441
    %v443 = vpop.f32.mrb[0].mxu0
    %v444 = vadd.f32 0.0, %v443
    %445 = vdwg.mxu0
    %446 = vmatprep.subr.mxu0 %v122
    %447 = vmatpush1.msra.mxu0 %v121
    %448 = vmatprep.subr.mxu0 %v130
    %449 = vmatpush1.msra.mxu0 %v129
    %450 = vmatprep.subr.mxu0 %v138
    %451 = vmatpush1.msra.mxu0 %v137
    %452 = vmatprep.subr.mxu0 %v146
    %453 = vmatpush1.msra.mxu0 %v145
    %454 = vmatprep.subr.mxu0 %v154
    %455 = vmatpush1.msra.mxu0 %v153
    %456 = vmatprep.subr.mxu0 %v162
    %457 = vmatpush1.msra.mxu0 %v161
    %458 = vmatprep.subr.mxu0 %v170
    %459 = vmatpush1.msra.mxu0 %v169
    %460 = vmatprep.subr.mxu0 %v178
    %461 = vmatpush1.msra.mxu0 %v177
    %462 = vmatprep.subr.mxu0 %v186
    %463 = vmatpush1.msra.mxu0 %v185
    %464 = vmatprep.subr.mxu0 %v194
    %465 = vmatpush1.msra.mxu0 %v193
    %466 = vmatprep.subr.mxu0 %v202
    %467 = vmatpush1.msra.mxu0 %v201
    %468 = vmatprep.subr.mxu0 %v210
    %469 = vmatpush1.msra.mxu0 %v209
    %470 = vmatprep.subr.mxu0 %v218
    %471 = vmatpush1.msra.mxu0 %v217
    %472 = vmatprep.subr.mxu0 %v226
    %473 = vmatpush1.msra.mxu0 %v225
    %474 = vmatprep.subr.mxu0 %v234
    %475 = vmatpush1.msra.mxu0 %v233
    %476 = vmatprep.subr.mxu0 %v242
    %477 = vmatpush1.msra.mxu0 %v241
    %478 = vmatprep.subr.mxu0 %v250
    %479 = vmatpush1.msra.mxu0 %v249
    %480 = vmatprep.subr.mxu0 %v258
    %481 = vmatpush1.msra.mxu0 %v257
    %482 = vmatprep.subr.mxu0 %v266
    %483 = vmatpush1.msra.mxu0 %v265
    %484 = vmatprep.subr.mxu0 %v274
    %485 = vmatpush1.msra.mxu0 %v273
    %486 = vmatprep.subr.mxu0 %v282
    %487 = vmatpush1.msra.mxu0 %v281
    %488 = vmatprep.subr.mxu0 %v290
    %489 = vmatpush1.msra.mxu0 %v289
    %490 = vmatprep.subr.mxu0 %v298
    %491 = vmatpush1.msra.mxu0 %v297
    %492 = vmatprep.subr.mxu0 %v306
    %493 = vmatpush1.msra.mxu0 %v305
    %494 = vmatprep.subr.mxu0 %v314
    %495 = vmatpush1.msra.mxu0 %v313
    %496 = vmatprep.subr.mxu0 %v322
    %497 = vmatpush1.msra.mxu0 %v321
    %498 = vmatprep.subr.mxu0 %v330
    %499 = vmatpush1.msra.mxu0 %v329
    %500 = vmatprep.subr.mxu0 %v338
    %501 = vmatpush1.msra.mxu0 %v337
    %502 = vmatprep.subr.mxu0 %v346
    %503 = vmatpush1.msra.mxu0 %v345
    %504 = vmatprep.subr.mxu0 %v354
    %505 = vmatpush1.msra.mxu0 %v353
    %506 = vmatprep.subr.mxu0 %v362
    %507 = vmatpush1.msra.mxu0 %v361
    %508 = vmatprep.subr.mxu0 %v370
    %509 = vmatpush1.msra.mxu0 %v369
    %510 = vmatprep.mubr.f32.mxu0 %v68
    %511 = vmatmul.mubr.f32.gmra.mrb[0].mxu0 %v67
    %v512 = vpop.f32.mrb[0].mxu0
    %v513 = vadd.f32 0.0, %v512
    %v514 = vpop.f32.mrb[0].mxu0
    %v515 = vadd.f32 0.0, %v514
    %516 = vdwg.mxu0
    %517 = vmatprep.subr.mxu0 %v124
    %518 = vmatpush1.msra.mxu0 %v123
    %519 = vmatprep.subr.mxu0 %v132
    %520 = vmatpush1.msra.mxu0 %v131
    %521 = vmatprep.subr.mxu0 %v140
    %522 = vmatpush1.msra.mxu0 %v139
    %523 = vmatprep.subr.mxu0 %v148
    %524 = vmatpush1.msra.mxu0 %v147
    %525 = vmatprep.subr.mxu0 %v156
    %526 = vmatpush1.msra.mxu0 %v155
    %527 = vmatprep.subr.mxu0 %v164
    %528 = vmatpush1.msra.mxu0 %v163
    %529 = vmatprep.subr.mxu0 %v172
    %530 = vmatpush1.msra.mxu0 %v171
    %531 = vmatprep.subr.mxu0 %v180
    %532 = vmatpush1.msra.mxu0 %v179
    %533 = vmatprep.subr.mxu0 %v188
    %534 = vmatpush1.msra.mxu0 %v187
    %535 = vmatprep.subr.mxu0 %v196
    %536 = vmatpush1.msra.mxu0 %v195
    %537 = vmatprep.subr.mxu0 %v204
    %538 = vmatpush1.msra.mxu0 %v203
    %539 = vmatprep.subr.mxu0 %v212
    %540 = vmatpush1.msra.mxu0 %v211
    %541 = vmatprep.subr.mxu0 %v220
    %542 = vmatpush1.msra.mxu0 %v219
    %543 = vmatprep.subr.mxu0 %v228
    %544 = vmatpush1.msra.mxu0 %v227
    %545 = vmatprep.subr.mxu0 %v236
    %546 = vmatpush1.msra.mxu0 %v235
    %547 = vmatprep.subr.mxu0 %v244
    %548 = vmatpush1.msra.mxu0 %v243
    %549 = vmatprep.subr.mxu0 %v252
    %550 = vmatpush1.msra.mxu0 %v251
    %551 = vmatprep.subr.mxu0 %v260
    %552 = vmatpush1.msra.mxu0 %v259
    %553 = vmatprep.subr.mxu0 %v268
    %554 = vmatpush1.msra.mxu0 %v267
    %555 = vmatprep.subr.mxu0 %v276
    %556 = vmatpush1.msra.mxu0 %v275
    %557 = vmatprep.subr.mxu0 %v284
    %558 = vmatpush1.msra.mxu0 %v283
    %559 = vmatprep.subr.mxu0 %v292
    %560 = vmatpush1.msra.mxu0 %v291
    %561 = vmatprep.subr.mxu0 %v300
    %562 = vmatpush1.msra.mxu0 %v299
    %563 = vmatprep.subr.mxu0 %v308
    %564 = vmatpush1.msra.mxu0 %v307
    %565 = vmatprep.subr.mxu0 %v316
    %566 = vmatpush1.msra.mxu0 %v315
    %567 = vmatprep.subr.mxu0 %v324
    %568 = vmatpush1.msra.mxu0 %v323
    %569 = vmatprep.subr.mxu0 %v332
    %570 = vmatpush1.msra.mxu0 %v331
    %571 = vmatprep.subr.mxu0 %v340
    %572 = vmatpush1.msra.mxu0 %v339
    %573 = vmatprep.subr.mxu0 %v348
    %574 = vmatpush1.msra.mxu0 %v347
    %575 = vmatprep.subr.mxu0 %v356
    %576 = vmatpush1.msra.mxu0 %v355
    %577 = vmatprep.subr.mxu0 %v364
    %578 = vmatpush1.msra.mxu0 %v363
    %579 = vmatprep.subr.mxu0 %v372
    %580 = vmatpush1.msra.mxu0 %v371
    %581 = vmatprep.mubr.f32.mxu0 %v68
    %582 = vmatmul.mubr.f32.gmra.mrb[0].mxu0 %v67
    %v583 = vpop.f32.mrb[0].mxu0
    %v584 = vadd.f32 0.0, %v583
    %v585 = vpop.f32.mrb[0].mxu0
    %v586 = vadd.f32 0.0, %v585
    %587 = vdwg.mxu0
    %588 = vmatprep.subr.mxu0 %v126
    %589 = vmatpush1.msra.mxu0 %v125
    %590 = vmatprep.subr.mxu0 %v134
    %591 = vmatpush1.msra.mxu0 %v133
    %592 = vmatprep.subr.mxu0 %v142
    %593 = vmatpush1.msra.mxu0 %v141
    %594 = vmatprep.subr.mxu0 %v150
    %595 = vmatpush1.msra.mxu0 %v149
    %596 = vmatprep.subr.mxu0 %v158
    %597 = vmatpush1.msra.mxu0 %v157
    %598 = vmatprep.subr.mxu0 %v166
    %599 = vmatpush1.msra.mxu0 %v165
    %600 = vmatprep.subr.mxu0 %v174
    %601 = vmatpush1.msra.mxu0 %v173
    %602 = vmatprep.subr.mxu0 %v182
    %603 = vmatpush1.msra.mxu0 %v181
    %604 = vmatprep.subr.mxu0 %v190
    %605 = vmatpush1.msra.mxu0 %v189
    %606 = vmatprep.subr.mxu0 %v198
    %607 = vmatpush1.msra.mxu0 %v197
    %608 = vmatprep.subr.mxu0 %v206
    %609 = vmatpush1.msra.mxu0 %v205
    %610 = vmatprep.subr.mxu0 %v214
    %611 = vmatpush1.msra.mxu0 %v213
    %612 = vmatprep.subr.mxu0 %v222
    %613 = vmatpush1.msra.mxu0 %v221
    %614 = vmatprep.subr.mxu0 %v230
    %615 = vmatpush1.msra.mxu0 %v229
    %616 = vmatprep.subr.mxu0 %v238
    %617 = vmatpush1.msra.mxu0 %v237
    %618 = vmatprep.subr.mxu0 %v246
    %619 = vmatpush1.msra.mxu0 %v245
    %620 = vmatprep.subr.mxu0 %v254
    %621 = vmatpush1.msra.mxu0 %v253
    %622 = vmatprep.subr.mxu0 %v262
    %623 = vmatpush1.msra.mxu0 %v261
    %624 = vmatprep.subr.mxu0 %v270
    %625 = vmatpush1.msra.mxu0 %v269
    %626 = vmatprep.subr.mxu0 %v278
    %627 = vmatpush1.msra.mxu0 %v277
    %628 = vmatprep.subr.mxu0 %v286
    %629 = vmatpush1.msra.mxu0 %v285
    %630 = vmatprep.subr.mxu0 %v294
    %631 = vmatpush1.msra.mxu0 %v293
    %632 = vmatprep.subr.mxu0 %v302
    %633 = vmatpush1.msra.mxu0 %v301
    %634 = vmatprep.subr.mxu0 %v310
    %635 = vmatpush1.msra.mxu0 %v309
    %636 = vmatprep.subr.mxu0 %v318
    %637 = vmatpush1.msra.mxu0 %v317
    %638 = vmatprep.subr.mxu0 %v326
    %639 = vmatpush1.msra.mxu0 %v325
    %640 = vmatprep.subr.mxu0 %v334
    %641 = vmatpush1.msra.mxu0 %v333
    %642 = vmatprep.subr.mxu0 %v342
    %643 = vmatpush1.msra.mxu0 %v341
    %644 = vmatprep.subr.mxu0 %v350
    %645 = vmatpush1.msra.mxu0 %v349
    %646 = vmatprep.subr.mxu0 %v358
    %647 = vmatpush1.msra.mxu0 %v357
    %648 = vmatprep.subr.mxu0 %v366
    %649 = vmatpush1.msra.mxu0 %v365
    %650 = vmatprep.subr.mxu0 %v374
    %651 = vmatpush1.msra.mxu0 %v373
    %652 = vmatprep.mubr.f32.mxu0 %v68
    %653 = vmatmul.mubr.f32.gmra.mrb[0].mxu0 %v67
    %v654 = vpop.f32.mrb[0].mxu0
    %v655 = vadd.f32 0.0, %v654
    %v656 = vpop.f32.mrb[0].mxu0
    %v657 = vadd.f32 0.0, %v656
    %658 = vdwg.mxu0
    %vm659 = vcmask 392192
    %v661 = vsel %vm659, %v66, 0
    %663 = vmatprep.subr.mxu0 %v72
    %664 = vmatpush1.msra.mxu0 %v71
    %665 = vmatprep.subr.mxu0 %v80
    %666 = vmatpush1.msra.mxu0 %v79
    %667 = vmatprep.subr.mxu0 %v88
    %668 = vmatpush1.msra.mxu0 %v87
    %669 = vmatprep.subr.mxu0 %v96
    %670 = vmatpush1.msra.mxu0 %v95
    %671 = vmatprep.subr.mxu0 %v104
    %672 = vmatpush1.msra.mxu0 %v103
    %673 = vmatprep.subr.mxu0 %v112
    %674 = vmatpush1.msra.mxu0 %v111
    %675 = vmatprep.subr.mxu0 0.0
    %676 = vmatpush1.msra.mxu0 0.0
    %677 = vmatprep.subr.mxu0 0.0
    %678 = vmatpush1.msra.mxu0 0.0
    %679 = vmatprep.subr.mxu0 0.0
    %680 = vmatpush1.msra.mxu0 0.0
    %681 = vmatprep.subr.mxu0 0.0
    %682 = vmatpush1.msra.mxu0 0.0
    %683 = vmatprep.subr.mxu0 0.0
    %684 = vmatpush1.msra.mxu0 0.0
    %685 = vmatprep.subr.mxu0 0.0
    %686 = vmatpush1.msra.mxu0 0.0
    %687 = vmatprep.subr.mxu0 0.0
    %688 = vmatpush1.msra.mxu0 0.0
    %689 = vmatprep.subr.mxu0 0.0
    %690 = vmatpush1.msra.mxu0 0.0
    %691 = vmatprep.subr.mxu0 0.0
    %692 = vmatpush1.msra.mxu0 0.0
    %693 = vmatprep.subr.mxu0 0.0
    %694 = vmatpush1.msra.mxu0 0.0
    %695 = vmatprep.subr.mxu0 0.0
    %696 = vmatpush1.msra.mxu0 0.0
    %697 = vmatprep.subr.mxu0 0.0
    %698 = vmatpush1.msra.mxu0 0.0
    %699 = vmatprep.subr.mxu0 0.0
    %700 = vmatpush1.msra.mxu0 0.0
    %701 = vmatprep.subr.mxu0 0.0
    %702 = vmatpush1.msra.mxu0 0.0
    %703 = vmatprep.subr.mxu0 0.0
    %704 = vmatpush1.msra.mxu0 0.0
    %705 = vmatprep.subr.mxu0 0.0
    %706 = vmatpush1.msra.mxu0 0.0
    %707 = vmatprep.subr.mxu0 0.0
    %708 = vmatpush1.msra.mxu0 0.0
    %709 = vmatprep.subr.mxu0 0.0
    %710 = vmatpush1.msra.mxu0 0.0
    %711 = vmatprep.subr.mxu0 0.0
    %712 = vmatpush1.msra.mxu0 0.0
    %713 = vmatprep.subr.mxu0 0.0
    %714 = vmatpush1.msra.mxu0 0.0
    %715 = vmatprep.subr.mxu0 0.0
    %716 = vmatpush1.msra.mxu0 0.0
    %717 = vmatprep.subr.mxu0 0.0
    %718 = vmatpush1.msra.mxu0 0.0
    %719 = vmatprep.subr.mxu0 0.0
    %720 = vmatpush1.msra.mxu0 0.0
    %721 = vmatprep.subr.mxu0 0.0
    %722 = vmatpush1.msra.mxu0 0.0
    %723 = vmatprep.subr.mxu0 0.0
    %724 = vmatpush1.msra.mxu0 0.0
    %725 = vmatprep.subr.mxu0 0.0
    %726 = vmatpush1.msra.mxu0 0.0
    %727 = vmatprep.mubr.f32.mxu0 0.0
    %728 = vmatmul.mubr.f32.gmra.mrb[0].mxu0 %v661
    %v729 = vpop.f32.mrb[0].mxu0
    %v730 = vadd.f32 %v442, %v729
    %v731 = vpop.f32.mrb[0].mxu0
    %v732 = vadd.f32 %v444, %v731
    %733 = vdwg.mxu0
    %734 = vmatprep.subr.mxu0 %v74
    %735 = vmatpush1.msra.mxu0 %v73
    %736 = vmatprep.subr.mxu0 %v82
    %737 = vmatpush1.msra.mxu0 %v81
    %738 = vmatprep.subr.mxu0 %v90
    %739 = vmatpush1.msra.mxu0 %v89
    %740 = vmatprep.subr.mxu0 %v98
    %741 = vmatpush1.msra.mxu0 %v97
    %742 = vmatprep.subr.mxu0 %v106
    %743 = vmatpush1.msra.mxu0 %v105
    %744 = vmatprep.subr.mxu0 %v114
    %745 = vmatpush1.msra.mxu0 %v113
    %746 = vmatprep.subr.mxu0 0.0
    %747 = vmatpush1.msra.mxu0 0.0
    %748 = vmatprep.subr.mxu0 0.0
    %749 = vmatpush1.msra.mxu0 0.0
    %750 = vmatprep.subr.mxu0 0.0
    %751 = vmatpush1.msra.mxu0 0.0
    %752 = vmatprep.subr.mxu0 0.0
    %753 = vmatpush1.msra.mxu0 0.0
    %754 = vmatprep.subr.mxu0 0.0
    %755 = vmatpush1.msra.mxu0 0.0
    %756 = vmatprep.subr.mxu0 0.0
    %757 = vmatpush1.msra.mxu0 0.0
    %758 = vmatprep.subr.mxu0 0.0
    %759 = vmatpush1.msra.mxu0 0.0
    %760 = vmatprep.subr.mxu0 0.0
    %761 = vmatpush1.msra.mxu0 0.0
    %762 = vmatprep.subr.mxu0 0.0
    %763 = vmatpush1.msra.mxu0 0.0
    %764 = vmatprep.subr.mxu0 0.0
    %765 = vmatpush1.msra.mxu0 0.0
    %766 = vmatprep.subr.mxu0 0.0
    %767 = vmatpush1.msra.mxu0 0.0
    %768 = vmatprep.subr.mxu0 0.0
    %769 = vmatpush1.msra.mxu0 0.0
    %770 = vmatprep.subr.mxu0 0.0
    %771 = vmatpush1.msra.mxu0 0.0
    %772 = vmatprep.subr.mxu0 0.0
    %773 = vmatpush1.msra.mxu0 0.0
    %774 = vmatprep.subr.mxu0 0.0
    %775 = vmatpush1.msra.mxu0 0.0
    %776 = vmatprep.subr.mxu0 0.0
    %777 = vmatpush1.msra.mxu0 0.0
    %778 = vmatprep.subr.mxu0 0.0
    %779 = vmatpush1.msra.mxu0 0.0
    %780 = vmatprep.subr.mxu0 0.0
    %781 = vmatpush1.msra.mxu0 0.0
    %782 = vmatprep.subr.mxu0 0.0
    %783 = vmatpush1.msra.mxu0 0.0
    %784 = vmatprep.subr.mxu0 0.0
    %785 = vmatpush1.msra.mxu0 0.0
    %786 = vmatprep.subr.mxu0 0.0
    %787 = vmatpush1.msra.mxu0 0.0
    %788 = vmatprep.subr.mxu0 0.0
    %789 = vmatpush1.msra.mxu0 0.0
    %790 = vmatprep.subr.mxu0 0.0
    %791 = vmatpush1.msra.mxu0 0.0
    %792 = vmatprep.subr.mxu0 0.0
    %793 = vmatpush1.msra.mxu0 0.0
    %794 = vmatprep.subr.mxu0 0.0
    %795 = vmatpush1.msra.mxu0 0.0
    %796 = vmatprep.subr.mxu0 0.0
    %797 = vmatpush1.msra.mxu0 0.0
    %798 = vmatprep.mubr.f32.mxu0 0.0
    %799 = vmatmul.mubr.f32.gmra.mrb[0].mxu0 %v661
    %v800 = vpop.f32.mrb[0].mxu0
    %v801 = vadd.f32 %v513, %v800
    %v802 = vpop.f32.mrb[0].mxu0
    %v803 = vadd.f32 %v515, %v802
    %804 = vdwg.mxu0
    %805 = vmatprep.subr.mxu0 %v76
    %806 = vmatpush1.msra.mxu0 %v75
    %807 = vmatprep.subr.mxu0 %v84
    %808 = vmatpush1.msra.mxu0 %v83
    %809 = vmatprep.subr.mxu0 %v92
    %810 = vmatpush1.msra.mxu0 %v91
    %811 = vmatprep.subr.mxu0 %v100
    %812 = vmatpush1.msra.mxu0 %v99
    %813 = vmatprep.subr.mxu0 %v108
    %814 = vmatpush1.msra.mxu0 %v107
    %815 = vmatprep.subr.mxu0 %v116
    %816 = vmatpush1.msra.mxu0 %v115
    %817 = vmatprep.subr.mxu0 0.0
    %818 = vmatpush1.msra.mxu0 0.0
    %819 = vmatprep.subr.mxu0 0.0
    %820 = vmatpush1.msra.mxu0 0.0
    %821 = vmatprep.subr.mxu0 0.0
    %822 = vmatpush1.msra.mxu0 0.0
    %823 = vmatprep.subr.mxu0 0.0
    %824 = vmatpush1.msra.mxu0 0.0
    %825 = vmatprep.subr.mxu0 0.0
    %826 = vmatpush1.msra.mxu0 0.0
    %827 = vmatprep.subr.mxu0 0.0
    %828 = vmatpush1.msra.mxu0 0.0
    %829 = vmatprep.subr.mxu0 0.0
    %830 = vmatpush1.msra.mxu0 0.0
    %831 = vmatprep.subr.mxu0 0.0
    %832 = vmatpush1.msra.mxu0 0.0
    %833 = vmatprep.subr.mxu0 0.0
    %834 = vmatpush1.msra.mxu0 0.0
    %835 = vmatprep.subr.mxu0 0.0
    %836 = vmatpush1.msra.mxu0 0.0
    %837 = vmatprep.subr.mxu0 0.0
    %838 = vmatpush1.msra.mxu0 0.0
    %839 = vmatprep.subr.mxu0 0.0
    %840 = vmatpush1.msra.mxu0 0.0
    %841 = vmatprep.subr.mxu0 0.0
    %842 = vmatpush1.msra.mxu0 0.0
    %843 = vmatprep.subr.mxu0 0.0
    %844 = vmatpush1.msra.mxu0 0.0
    %845 = vmatprep.subr.mxu0 0.0
    %846 = vmatpush1.msra.mxu0 0.0
    %847 = vmatprep.subr.mxu0 0.0
    %848 = vmatpush1.msra.mxu0 0.0
    %849 = vmatprep.subr.mxu0 0.0
    %850 = vmatpush1.msra.mxu0 0.0
    %851 = vmatprep.subr.mxu0 0.0
    %852 = vmatpush1.msra.mxu0 0.0
    %853 = vmatprep.subr.mxu0 0.0
    %854 = vmatpush1.msra.mxu0 0.0
    %855 = vmatprep.subr.mxu0 0.0
    %856 = vmatpush1.msra.mxu0 0.0
    %857 = vmatprep.subr.mxu0 0.0
    %858 = vmatpush1.msra.mxu0 0.0
    %859 = vmatprep.subr.mxu0 0.0
    %860 = vmatpush1.msra.mxu0 0.0
    %861 = vmatprep.subr.mxu0 0.0
    %862 = vmatpush1.msra.mxu0 0.0
    %863 = vmatprep.subr.mxu0 0.0
    %864 = vmatpush1.msra.mxu0 0.0
    %865 = vmatprep.subr.mxu0 0.0
    %866 = vmatpush1.msra.mxu0 0.0
    %867 = vmatprep.subr.mxu0 0.0
    %868 = vmatpush1.msra.mxu0 0.0
    %869 = vmatprep.mubr.f32.mxu0 0.0
    %870 = vmatmul.mubr.f32.gmra.mrb[0].mxu0 %v661
    %v871 = vpop.f32.mrb[0].mxu0
    %v872 = vadd.f32 %v584, %v871
    %v873 = vpop.f32.mrb[0].mxu0
    %v874 = vadd.f32 %v586, %v873
    %875 = vdwg.mxu0
    %876 = vmatprep.subr.mxu0 %v78
    %877 = vmatpush1.msra.mxu0 %v77
    %878 = vmatprep.subr.mxu0 %v86
    %879 = vmatpush1.msra.mxu0 %v85
    %880 = vmatprep.subr.mxu0 %v94
    %881 = vmatpush1.msra.mxu0 %v93
    %882 = vmatprep.subr.mxu0 %v102
    %883 = vmatpush1.msra.mxu0 %v101
    %884 = vmatprep.subr.mxu0 %v110
    %885 = vmatpush1.msra.mxu0 %v109
    %886 = vmatprep.subr.mxu0 %v118
    %887 = vmatpush1.msra.mxu0 %v117
    %888 = vmatprep.subr.mxu0 0.0
    %889 = vmatpush1.msra.mxu0 0.0
    %890 = vmatprep.subr.mxu0 0.0
    %891 = vmatpush1.msra.mxu0 0.0
    %892 = vmatprep.subr.mxu0 0.0
    %893 = vmatpush1.msra.mxu0 0.0
    %894 = vmatprep.subr.mxu0 0.0
    %895 = vmatpush1.msra.mxu0 0.0
    %896 = vmatprep.subr.mxu0 0.0
    %897 = vmatpush1.msra.mxu0 0.0
    %898 = vmatprep.subr.mxu0 0.0
    %899 = vmatpush1.msra.mxu0 0.0
    %900 = vmatprep.subr.mxu0 0.0
    %901 = vmatpush1.msra.mxu0 0.0
    %902 = vmatprep.subr.mxu0 0.0
    %903 = vmatpush1.msra.mxu0 0.0
    %904 = vmatprep.subr.mxu0 0.0
    %905 = vmatpush1.msra.mxu0 0.0
    %906 = vmatprep.subr.mxu0 0.0
    %907 = vmatpush1.msra.mxu0 0.0
    %908 = vmatprep.subr.mxu0 0.0
    %909 = vmatpush1.msra.mxu0 0.0
    %910 = vmatprep.subr.mxu0 0.0
    %911 = vmatpush1.msra.mxu0 0.0
    %912 = vmatprep.subr.mxu0 0.0
    %913 = vmatpush1.msra.mxu0 0.0
    %914 = vmatprep.subr.mxu0 0.0
    %915 = vmatpush1.msra.mxu0 0.0
    %916 = vmatprep.subr.mxu0 0.0
    %917 = vmatpush1.msra.mxu0 0.0
    %918 = vmatprep.subr.mxu0 0.0
    %919 = vmatpush1.msra.mxu0 0.0
    %920 = vmatprep.subr.mxu0 0.0
    %921 = vmatpush1.msra.mxu0 0.0
    %922 = vmatprep.subr.mxu0 0.0
    %923 = vmatpush1.msra.mxu0 0.0
    %924 = vmatprep.subr.mxu0 0.0
    %925 = vmatpush1.msra.mxu0 0.0
    %926 = vmatprep.subr.mxu0 0.0
    %927 = vmatpush1.msra.mxu0 0.0
    %928 = vmatprep.subr.mxu0 0.0
    %929 = vmatpush1.msra.mxu0 0.0
    %930 = vmatprep.subr.mxu0 0.0
    %931 = vmatpush1.msra.mxu0 0.0
    %932 = vmatprep.subr.mxu0 0.0
    %933 = vmatpush1.msra.mxu0 0.0
    %934 = vmatprep.subr.mxu0 0.0
    %935 = vmatpush1.msra.mxu0 0.0
    %936 = vmatprep.subr.mxu0 0.0
    %937 = vmatpush1.msra.mxu0 0.0
    %938 = vmatprep.subr.mxu0 0.0
    %939 = vmatpush1.msra.mxu0 0.0
    %940 = vmatprep.mubr.f32.mxu0 0.0
    %941 = vmatmul.mubr.f32.gmra.mrb[0].mxu0 %v661
    %v942 = vpop.f32.mrb[0].mxu0
    %v943 = vadd.f32 %v655, %v942
    %v944 = vpop.f32.mrb[0].mxu0
    %v945 = vadd.f32 %v657, %v944
    %946 = vdwg.mxu0
    %v947 = vld [vmem:[%s5] sm:$0xff]
    %v949 = vlaneseq
    %v950 = vshrl.u32 %v949, 7
    %v951 = vsub.s32 0, %v950
    %v952 = vrot.slane %v947, %v951
    %v953 = vlaneseq
    %v954 = vshrl.u32 %v953, 7
    %v955 = vsub.s32 1, %v954
    %v956 = vrot.slane %v947, %v955
    %v957 = vlaneseq
    %v958 = vshrl.u32 %v957, 7
    %v959 = vsub.s32 2, %v958
    %v960 = vrot.slane %v947, %v959
    %v961 = vlaneseq
    %v962 = vshrl.u32 %v961, 7
    %v963 = vsub.s32 3, %v962
    %v964 = vrot.slane %v947, %v963
    %v965 = vlaneseq
    %v966 = vshrl.u32 %v965, 7
    %v967 = vsub.s32 4, %v966
    %v968 = vrot.slane %v947, %v967
    %v969 = vlaneseq
    %v970 = vshrl.u32 %v969, 7
    %v971 = vsub.s32 5, %v970
    %v972 = vrot.slane %v947, %v971
    %v973 = vlaneseq
    %v974 = vshrl.u32 %v973, 7
    %v975 = vsub.s32 6, %v974
    %v976 = vrot.slane %v947, %v975
    %v977 = vlaneseq
    %v978 = vshrl.u32 %v977, 7
    %v979 = vsub.s32 7, %v978
    %v980 = vrot.slane %v947, %v979
    %v989 = vadd.f32 %v730, %v952
    %v990 = vadd.f32 %v732, %v956
    %v991 = vadd.f32 %v801, %v960
    %v992 = vadd.f32 %v803, %v964
    %v993 = vadd.f32 %v872, %v968
    %v994 = vadd.f32 %v874, %v972
    %v995 = vadd.f32 %v943, %v976
    %v996 = vadd.f32 %v945, %v980
    %v997 = vsub.f32 0.0, %v989
    %v998 = vsub.f32 0.0, %v990
    %v999 = vmul.f32 %v997, 1.442695
    %v1000 = vpow.pop %v999
    %v1001 = vmul.f32 %v998, 1.442695
    %v1002 = vpow.pop %v1001
    %v1003 = vadd.f32 %v1000, 1.0
    %v1004 = vadd.f32 %v1002, 1.0
    %v1005 = vrcp.pop %v1003
    %v1006 = vmul.f32 1.0, %v1005
    %v1007 = vrcp.pop %v1004
    %v1008 = vmul.f32 1.0, %v1007
    %v1009 = vsub.f32 0.0, %v991
    %v1010 = vsub.f32 0.0, %v992
    %v1011 = vmul.f32 %v1009, 1.442695
    %v1012 = vpow.pop %v1011
    %v1013 = vmul.f32 %v1010, 1.442695
    %v1014 = vpow.pop %v1013
    %v1015 = vadd.f32 %v1012, 1.0
    %v1016 = vadd.f32 %v1014, 1.0
    %v1017 = vrcp.pop %v1015
    %v1018 = vmul.f32 1.0, %v1017
    %v1019 = vrcp.pop %v1016
    %v1020 = vmul.f32 1.0, %v1019
    %v1021 = vtanh.pop %v993
    %v1022 = vtanh.pop %v994
    %v1023 = vsub.f32 0.0, %v995
    %v1024 = vsub.f32 0.0, %v996
    %v1025 = vmul.f32 %v1023, 1.442695
    %v1026 = vpow.pop %v1025
    %v1027 = vmul.f32 %v1024, 1.442695
    %v1028 = vpow.pop %v1027
    %v1029 = vadd.f32 %v1026, 1.0
    %v1030 = vadd.f32 %v1028, 1.0
    %v1031 = vrcp.pop %v1029
    %v1032 = vmul.f32 1.0, %v1031
    %v1033 = vrcp.pop %v1030
    %v1034 = vmul.f32 1.0, %v1033
    %v1035 = vmul.f32 %v1018, %v69
    %v1036 = vmul.f32 %v1020, %v70
    %v1037 = vmul.f32 %v1006, %v1021
    %v1038 = vmul.f32 %v1008, %v1022
    %v1039 = vadd.f32 %v1035, %v1037
    %v1040 = vadd.f32 %v1036, %v1038
    %v1041 = vtanh.pop %v1039
    %v1042 = vtanh.pop %v1040
    %v1043 = vmul.f32 %v1032, %v1041
    %v1044 = vmul.f32 %v1034, %v1042
    %1045 = vst [vmem:[#allocation2] sm:$0xff] %v1043
    %1046 = vst [vmem:[#allocation2 + $0x8] sm:$0xff] %v1044
    %1047 = vst [vmem:[#allocation3] sm:$0xff] %v1039
    %1048 = vst [vmem:[#allocation3 + $0x8] sm:$0xff] %v1040
    %1049 = vst [vmem:[%s6] sm:$0xff] %v1043
    %1050 = vst [vmem:[%s6 + $0x8] sm:$0xff] %v1044
    // Predicated region
    $region38: #{_memory_forward_impl.1} parent=1 // pred_check
      %p1051 = pneg %p54
    $region39: #{_memory_forward_impl.1} parent=1 // pred_check_branch
      %1053 = sbr.rel (%p1051) target = $region41
    $region40: #{_memory_forward_impl.1} parent=1 // pred_region
      %1054 = vst [vmem:[%s7] sm:$0xff] %v1043
      %1055 = vst [vmem:[%s7 + $0x8] sm:$0xff] %v1044
      %1056 = vst [vmem:[%s8] sm:$0xff] %v1039
      %1057 = vst [vmem:[%s8 + $0x8] sm:$0xff] %v1040
    $region41: #{_memory_forward_impl.1} parent=1 // pred_fallthru
      _
    // Predicated region
    $region42: #{_memory_forward_impl.1} parent=1 // pred_check
      _
    $region43: #{_memory_forward_impl.1} parent=1 // pred_check_branch
      %1059 = sbr.rel (0) target = $region45
    $region44: #{_memory_forward_impl.1} parent=1 // pred_region
      _
    $region45: #{_memory_forward_impl.1} parent=1 // pred_fallthru
      _
    // Predicated region
    $region46: #{_memory_forward_impl.1} parent=1 // pred_check
      _
    $region47: #{_memory_forward_impl.1} parent=1 // pred_check_branch
      %1061 = sbr.rel (0) target = $region49
    $region48: #{_memory_forward_impl.1} parent=1 // pred_region
      _
    $region49: #{_memory_forward_impl.1} parent=1 // pred_fallthru
      _
    // Predicated region
    $region50: #{_memory_forward_impl.1} parent=1 // pred_check
      _
    $region51: #{_memory_forward_impl.1} parent=1 // pred_check_branch
      %1063 = sbr.rel (0) target = $region53
    $region52: #{_memory_forward_impl.1} parent=1 // pred_region
      _
    $region53: #{_memory_forward_impl.1} parent=1 // pred_fallthru
      _
    // Predicated region
    $region54: #{_memory_forward_impl.1} parent=1 // pred_check
      _
    $region55: #{_memory_forward_impl.1} parent=1 // pred_check_branch
      %1065 = sbr.rel (0) target = $region57
    $region56: #{_memory_forward_impl.1} parent=1 // pred_region
      _
    $region57: #{_memory_forward_impl.1} parent=1 // pred_fallthru
      _
    // Predicated region
    $region58: #{_memory_forward_impl.1} parent=1 // pred_check
      _
    $region59: #{_memory_forward_impl.1} parent=1 // pred_check_branch
      %1067 = sbr.rel (0) target = $region61
    $region60: #{_memory_forward_impl.1} parent=1 // pred_region
      _
    $region61: #{_memory_forward_impl.1} parent=1 // pred_fallthru
      _
    // Predicated region
    $region62: #{_memory_forward_impl.1} parent=1 // pred_check
      _
    $region63: #{_memory_forward_impl.1} parent=1 // pred_check_branch
      %1069 = sbr.rel (0) target = $region65
    $region64: #{_memory_forward_impl.1} parent=1 // pred_region
      _
    $region65: #{_memory_forward_impl.1} parent=1 // pred_fallthru
      _
    %1070 = vsyncpa [#allocation5], 1
    %1071 = vsyncpa [#allocation7], 1

</llo_original>
